<compile_context>
chip_gen: v6e
topology: v6e:2x2x1
jax: 0.10.0
libtpu: 0.0.40
codegen_flags: <defaults>
</compile_context>

<pallas_src>
import functools

import jax
import jax.numpy as jnp
from jax import lax
from jax.experimental import pallas as pl
from jax.experimental.pallas import tpu as pltpu


_LANE_CANDIDATES = (2048, 1024, 512, 256, 128)
_TARGET_TILE_BYTES = 4 * 1024 * 1024   # per input buffer; x2 inputs x2 bufs = 16 MiB


def _round_up(x, m):
  return ((x + m - 1) // m) * m


# --------------------------------------------------------------------------
# Kernel 1: streaming partial-sum of squared reconstruction error.
# Grid = (n_tiles,), reduction ("arbitrary") axis; psum block is resident
# (same block index every step) and acts as the accumulator.
# --------------------------------------------------------------------------
def _mse_partial_kernel(timg_ref, rimg_ref, psum_ref, *, n_rows, tile_r, ragged):
  i = pl.program_id(0)

  @pl.when(i == 0)
  def _():
    psum_ref[...] = jnp.zeros_like(psum_ref)

  d = rimg_ref[...].astype(jnp.float32) - timg_ref[...].astype(jnp.float32)
  sq = d * d
  if ragged:
    # The last tile extends past n_rows; Pallas pads it with undefined data,
    # so mask out-of-range rows (cheap VALU select; the loop is HBM-bound).
    row = i * tile_r + lax.broadcasted_iota(jnp.int32, sq.shape, 0)
    sq = jnp.where(row < n_rows, sq, 0.0)
  psum_ref[...] += jnp.sum(sq, axis=0, keepdims=True)


# --------------------------------------------------------------------------
# Kernel 2: DSN orthogonality ("difference") loss, one-shot.
# Gram identity: mean((s^T x)^2) == sum((s s^T) * (x x^T)) / (Ds * Dt),
# so the matmuls contract over the long D axes and produce only (B, B).
# --------------------------------------------------------------------------
def _diff_loss_kernel(sty_ref, txt_ref, diff_ref):
  s = sty_ref[...].astype(jnp.float32)                     # (B, Ds)
  x = txt_ref[...].astype(jnp.float32)                     # (B, Dt)
  # zero-mean across the batch dimension
  s = s - jnp.mean(s, axis=0, keepdims=True)
  x = x - jnp.mean(x, axis=0, keepdims=True)
  # L2-normalize each row (eps matches the usual torch impl).
  # TODO(synk): if a VJP is ever added, wrap the norms in stop_gradient to
  # match the detached-norm semantics of the torch DiffLoss.
  s = s / (jnp.sqrt(jnp.sum(s * s, axis=1, keepdims=True)) + 1e-6)
  x = x / (jnp.sqrt(jnp.sum(x * x, axis=1, keepdims=True)) + 1e-6)
  gs = lax.dot_general(s, s, (((1,), (1,)), ((), ())),
                       preferred_element_type=jnp.float32)
  gx = lax.dot_general(x, x, (((1,), (1,)), ((), ())),
                       preferred_element_type=jnp.float32)
  denom = float(sty_ref.shape[1] * txt_ref.shape[1])
  diff = jnp.sum(gs * gx) / denom
  diff_ref[...] = jnp.full(diff_ref.shape, diff, jnp.float32)


def style_diff_loss(targets, predictions, config=None):
  """JAX/Pallas equivalent of StyleDiffLoss.forward."""
  config = config or {}
  alpha = float(config.get('loss_weight_rec', 1.0))
  beta = float(config.get('loss_weight_diff', 1.0))

  t_img, _t_label = targets[:2]
  (_uni_code, rec_img, _weights, _scores,
   style_embs, text_embs, _ref_embs) = predictions

  total_elems = int(t_img.size)
  itemsize = t_img.dtype.itemsize

  # ---- lane-dense image slab (copy-free reshape on the common path) ------
  if total_elems % 128 == 0:
    lanes = next(c for c in _LANE_CANDIDATES if total_elems % c == 0)
    timg2 = t_img.reshape(-1, lanes)
    rimg2 = rec_img.reshape(-1, lanes)
  else:
    # Rare ragged-size fallback: a single small pad (materializes one copy);
    # zero padding contributes 0 to the squared-error sum.
    lanes = 512
    pad = _round_up(total_elems, lanes) - total_elems
    timg2 = jnp.pad(t_img.reshape(-1), (0, pad)).reshape(-1, lanes)
    rimg2 = jnp.pad(rec_img.reshape(-1), (0, pad)).reshape(-1, lanes)
  n_rows = timg2.shape[0]

  # ---- tile sizing: ~4 MiB per input buffer ------------------------------
  target_rows = max(8, (_TARGET_TILE_BYTES // (lanes * itemsize)) // 8 * 8)
  if n_rows <= target_rows:
    tile_r = n_rows              # full-dim block (allowed for any row count)
    n_tiles = 1
  else:
    tile_r = target_rows         # multiple of 8
    n_tiles = pl.cdiv(n_rows, tile_r)
  ragged = (n_rows % tile_r) != 0

  img_spec = pl.BlockSpec((tile_r, lanes), lambda i: (i, 0))
  psum_spec = pl.BlockSpec((1, lanes), lambda i: (0, 0))

  mse_cost = pl.CostEstimate(
      flops=3 * total_elems,
      transcendentals=0,
      bytes_accessed=2 * total_elems * itemsize + lanes * 4)

  mse_kernel = functools.partial(
      _mse_partial_kernel, n_rows=n_rows, tile_r=tile_r, ragged=ragged)

  psum = pl.pallas_call(
      mse_kernel,
      grid=(n_tiles,),
      in_specs=[img_spec, img_spec],
      out_specs=psum_spec,
      out_shape=jax.ShapeDtypeStruct((1, lanes), jnp.float32),
      compiler_params=pltpu.CompilerParams(
          dimension_semantics=("arbitrary",),
          vmem_limit_bytes=32 * 1024 * 1024),
      cost_estimate=mse_cost,
  )(timg2, rimg2)

  rec_mse = jnp.sum(psum) / float(total_elems)

  # ---- DiffLoss2 in its own tiny call ------------------------------------
  b = style_embs.shape[0]
  sty2 = style_embs.reshape(b, -1)
  txt2 = text_embs.reshape(b, -1)
  ds, dt = sty2.shape[1], txt2.shape[1]

  diff_cost = pl.CostEstimate(
      flops=2 * b * b * (ds + dt) + 6 * b * (ds + dt),
      transcendentals=2 * b,
      bytes_accessed=(sty2.size * sty2.dtype.itemsize
                      + txt2.size * txt2.dtype.itemsize + 128 * 4))

  diff_vec = pl.pallas_call(
      _diff_loss_kernel,
      grid=(1,),
      in_specs=[pl.BlockSpec((b, ds), lambda i: (0, 0)),
                pl.BlockSpec((b, dt), lambda i: (0, 0))],
      out_specs=pl.BlockSpec((1, 128), lambda i: (0, 0)),
      out_shape=jax.ShapeDtypeStruct((1, 128), jnp.float32),
      cost_estimate=diff_cost,
  )(sty2, txt2)
  diff = diff_vec[0, 0]

  total = alpha * rec_mse + beta * diff
  return total, {'rec_mse': rec_mse, 'diff': diff}


def _reference(targets, predictions, alpha=1.0, beta=1.0):
  """Pure-JAX reference for sanity checking."""
  t_img, _ = targets[:2]
  _, rec_img, _, _, style_embs, text_embs, _ = predictions
  rec_mse = jnp.mean((rec_img - t_img) ** 2)
  b = style_embs.shape[0]
  s = style_embs.reshape(b, -1)
  t = text_embs.reshape(b, -1)
  s = s - jnp.mean(s, axis=0, keepdims=True)
  t = t - jnp.mean(t, axis=0, keepdims=True)
  s = s / (jnp.linalg.norm(s, axis=1, keepdims=True) + 1e-6)
  t = t / (jnp.linalg.norm(t, axis=1, keepdims=True) + 1e-6)
  c = s.T @ t
  diff = jnp.mean(c ** 2)
  return alpha * rec_mse + beta * diff, rec_mse, diff


if __name__ == "__main__":
  key = jax.random.PRNGKey(0)
  kb = jax.random.split(key, 8)

  B, C, H, W = 2, 4, 16, 16      # NCHW image-like tensors
  D = 32                         # embedding dim

  t_img = jax.random.normal(kb[0], (B, C, H, W), jnp.float32)
  t_label = jax.random.randint(kb[1], (B,), 0, 10)

  uni_code = jax.random.normal(kb[2], (B, D), jnp.float32)
  rec_img = jax.random.normal(kb[3], (B, C, H, W), jnp.float32)
  weights = jax.random.normal(kb[4], (B, 8), jnp.float32)
  scores = jax.random.normal(kb[5], (B, 8), jnp.float32)
  style_embs = jax.random.normal(kb[6], (B, D), jnp.float32)
  text_embs = jax.random.normal(kb[7], (B, D), jnp.float32)
  ref_embs = style_embs + 0.1

  targets = (t_img, t_label)
  predictions = (uni_code, rec_img, weights, scores,
                 style_embs, text_embs, ref_embs)

  config = {'loss_weight_rec': 1.0, 'loss_weight_diff': 1.0}

  total, aux = style_diff_loss(targets, predictions, config)
  jax.block_until_ready(total)

  ref_total, ref_mse, ref_diff = _reference(targets, predictions)
  assert jnp.allclose(total, ref_total, rtol=1e-5, atol=1e-5)
  assert jnp.allclose(aux['rec_mse'], ref_mse, rtol=1e-5, atol=1e-5)
  assert jnp.allclose(aux['diff'], ref_diff, rtol=1e-5, atol=1e-5)

  print("KERNEL_OK")
</pallas_src>

<mosaic_0001>
module attributes {stable_mosaic.version = 11 : i64} {
  func.func @_mse_partial_kernel(%arg0: i32, %arg1: memref<1x2048xf32, #tpu.memory_space<vmem>>, %arg2: memref<1x2048xf32, #tpu.memory_space<vmem>>, %arg3: memref<1x2048xf32, #tpu.memory_space<vmem>>) attributes {dimension_semantics = [#tpu.dimension_semantics<arbitrary>], iteration_bounds = array<i64: 1>, scalar_prefetch = 0 : i64, scratch_operands = 0 : i64, tpu.core_type = #tpu.core_type<tc>, window_params = [{transform_indices = @transform_0, window_bounds = array<i64: 1, 2048>}, {transform_indices = @transform_1, window_bounds = array<i64: 1, 2048>}, {pipeline_mode = #tpu.pipeline_mode<synchronous>, transform_indices = @transform_2, window_bounds = array<i64: 1, 2048>}]} {
    %c0_i32 = arith.constant 0 : i32
    %0 = arith.cmpi eq, %arg0, %c0_i32 : i32
    %1 = arith.extui %0 : i1 to i32
    %c0_i32_0 = arith.constant 0 : i32
    %2 = arith.cmpi ne, %1, %c0_i32_0 : i32
    scf.if %2 {
      %cst_8 = arith.constant 0.000000e+00 : f32
      %12 = vector.broadcast %cst_8 : f32 to vector<1x2048xf32>
      %c0_9 = arith.constant 0 : index
      %c0_10 = arith.constant 0 : index
      %13 = vector.load %arg3[%c0_9, %c0_10] : memref<1x2048xf32, #tpu.memory_space<vmem>>, vector<1x2048xf32>
      tpu.vector_store %arg3[%c0_9, %c0_10], %12 {strides = array<i32>} : memref<1x2048xf32, #tpu.memory_space<vmem>>, vector<1x2048xf32>,
    } else {
    }
    %c0 = arith.constant 0 : index
    %c0_1 = arith.constant 0 : index
    %3 = vector.load %arg2[%c0, %c0_1] : memref<1x2048xf32, #tpu.memory_space<vmem>>, vector<1x2048xf32>
    %c0_2 = arith.constant 0 : index
    %c0_3 = arith.constant 0 : index
    %4 = vector.load %arg1[%c0_2, %c0_3] : memref<1x2048xf32, #tpu.memory_space<vmem>>, vector<1x2048xf32>
    %5 = arith.subf %3, %4 : vector<1x2048xf32>
    %6 = arith.mulf %5, %5 : vector<1x2048xf32>
    %c0_4 = arith.constant 0 : index
    %c0_5 = arith.constant 0 : index
    %7 = vector.load %arg3[%c0_4, %c0_5] : memref<1x2048xf32, #tpu.memory_space<vmem>>, vector<1x2048xf32>
    %cst = arith.constant dense<0.000000e+00> : vector<2048xf32>
    %8 = vector.multi_reduction <add>, %6, %cst [0] : vector<1x2048xf32> to vector<2048xf32>
    %9 = vector.shape_cast %8 : vector<2048xf32> to vector<1x2048xf32>
    %10 = arith.addf %7, %9 : vector<1x2048xf32>
    %c0_6 = arith.constant 0 : index
    %c0_7 = arith.constant 0 : index
    %11 = vector.load %arg3[%c0_6, %c0_7] : memref<1x2048xf32, #tpu.memory_space<vmem>>, vector<1x2048xf32>
    tpu.vector_store %arg3[%c0_6, %c0_7], %10 {strides = array<i32>} : memref<1x2048xf32, #tpu.memory_space<vmem>>, vector<1x2048xf32>,
    return
  }
  func.func @transform_0(%arg0: i32) -> (i32, i32) {
    %c0_i32 = arith.constant 0 : i32
    %c0_i32_0 = arith.constant 0 : i32
    return %arg0, %c0_i32 : i32, i32
  }
  func.func @transform_1(%arg0: i32) -> (i32, i32) {
    %c0_i32 = arith.constant 0 : i32
    %c0_i32_0 = arith.constant 0 : i32
    return %arg0, %c0_i32 : i32, i32
  }
  func.func @transform_2(%arg0: i32) -> (i32, i32) {
    %c0_i32 = arith.constant 0 : i32
    %c0_i32_0 = arith.constant 0 : i32
    %c0_i32_1 = arith.constant 0 : i32
    return %c0_i32, %c0_i32_0 : i32, i32
  }
}

</mosaic_0001>

<llo_original>
// kernel: tpu_custom_call.1
$region0: #{tpu_custom_call.1}
  #allocation0 [shape = 'u32[]', space=smem, size = 0x4, offset = 0x4, fixed_abs, tag = 'smem constant byte address 0x4 - core index']
  #allocation1 [shape = 'u32[144,128]{1,0:T(1,128)}', space=vmem, size = 0x12000, scoped, tag = 'internal scratch']
  %s0 = inlined_call_operand.hbm [shape: f32[1,2048], index: 0, kind: input, shape index: {}]
  %s1 = inlined_call_operand.hbm [shape: f32[1,2048], index: 1, kind: input, shape index: {}]
  %s2 = inlined_call_operand.hbm [shape: f32[1,2048], index: 2, kind: output, shape index: {}]
  %s3 = sld [smem:[#allocation0]]
  $region30: #{tpu_custom_call.1} parent=0
    _
  %s5 = ssub.s32 1, %s3
  %s6 = scalar_select 0, %s5, %s3
  $region1: #{tpu_custom_call.1} parent=0
    #allocation2 [shape = 'u8[8192]{0}', space=vmem, size = 0x2000, scoped, tag = 'input window, operand 0, single buffered']
    #allocation3 [shape = 's32[1]{0}', space=sflag, size = 0x4, scoped, tag = 'scoped memory for tpu_custom_call.1']
    #allocation4 [shape = 's32[1]{0}', space=sflag, size = 0x4, scoped, tag = 'scoped memory for tpu_custom_call.1']
    #allocation5 [shape = 'u8[8192]{0}', space=vmem, size = 0x2000, scoped, tag = 'input window, operand 1, single buffered']
    #allocation6 [shape = 's32[1]{0}', space=sflag, size = 0x4, scoped, tag = 'scoped memory for tpu_custom_call.1']
    #allocation7 [shape = 'u8[8192]{0}', space=vmem, size = 0x2000, scoped, tag = 'output window, operand 0, single buffered']
    %7 = vsyncpa [#allocation3], 0
    %8 = vsyncpa [#allocation6], 0
    %9 = vsyncpa [#allocation4], 0
    // Predicated region
    $region2: #{tpu_custom_call.1} parent=1 // pred_check
      _
    $region3: #{tpu_custom_call.1} parent=1 // pred_check_branch
      %11 = sbr.rel (0) target = $region5
    $region4: #{tpu_custom_call.1} parent=1 // pred_region
      %s13 = ssub.s32 256, 256
      %14 = vsyncadd [#allocation3], %s13
      %s16 = sshll.u32 [#allocation2], 4
      %s17 = int_to_ptr.vmem [resolvable:$true] %s16
      %19 = dma.hbm_to_vmem [thread:$0]  %s0, 256, %s17, [#allocation3]
    $region5: #{tpu_custom_call.1} parent=1 // pred_fallthru
      _
    // Predicated region
    $region6: #{tpu_custom_call.1} parent=1 // pred_check
      _
    $region7: #{tpu_custom_call.1} parent=1 // pred_check_branch
      %21 = sbr.rel (0) target = $region9
    $region8: #{tpu_custom_call.1} parent=1 // pred_region
      %s23 = ssub.s32 256, 256
      %24 = vsyncadd [#allocation6], %s23
      %s26 = sshll.u32 [#allocation5], 4
      %s27 = int_to_ptr.vmem [resolvable:$true] %s26
      %29 = dma.hbm_to_vmem [thread:$0]  %s1, 256, %s27, [#allocation6]
    $region9: #{tpu_custom_call.1} parent=1 // pred_fallthru
      _
    // Predicated region
    $region10: #{tpu_custom_call.1} parent=1 // pred_check
      _
    $region11: #{tpu_custom_call.1} parent=1 // pred_check_branch
      %31 = sbr.rel (0) target = $region13
    $region12: #{tpu_custom_call.1} parent=1 // pred_region
      %32 = dma.done [#allocation3], 256
    $region13: #{tpu_custom_call.1} parent=1 // pred_fallthru
      _
    // Predicated region
    $region14: #{tpu_custom_call.1} parent=1 // pred_check
      _
    $region15: #{tpu_custom_call.1} parent=1 // pred_check_branch
      %34 = sbr.rel (0) target = $region17
    $region16: #{tpu_custom_call.1} parent=1 // pred_region
      %35 = dma.done [#allocation6], 256
    $region17: #{tpu_custom_call.1} parent=1 // pred_fallthru
      _
    %p36 = scmp.eq.s32.totalorder 0, 0
    // Predicated region
    $region18: #{tpu_custom_call.1} parent=1 // pred_check
      %p37 = pneg %p36
    $region19: #{tpu_custom_call.1} parent=1 // pred_check_branch
      %39 = sbr.rel (%p37) target = $region21
    $region20: #{tpu_custom_call.1} parent=1 // pred_region
      %40 = vst [vmem:[#allocation7] sm:$0xff] 0.0
      %41 = vst [vmem:[#allocation7 + $0x8] sm:$0xff] 0.0
    $region21: #{tpu_custom_call.1} parent=1 // pred_fallthru
      _
    %v42 = vld [vmem:[#allocation5] sm:$0xff]
    %v43 = vld [vmem:[#allocation5 + $0x8] sm:$0xff]
    %v44 = vld [vmem:[#allocation2] sm:$0xff]
    %v45 = vld [vmem:[#allocation2 + $0x8] sm:$0xff]
    %v46 = vsub.f32 %v42, %v44
    %v47 = vsub.f32 %v43, %v45
    %v48 = vmul.f32 %v46, %v46
    %v49 = vmul.f32 %v47, %v47
    %v50 = vld [vmem:[#allocation7] sm:$0xff]
    %v51 = vld [vmem:[#allocation7 + $0x8] sm:$0xff]
    %v52 = vadd.f32 %v48, 0.0
    %v53 = vadd.f32 %v49, 0.0
    %v54 = vadd.f32 %v50, %v52
    %v55 = vadd.f32 %v51, %v53
    %56 = vst [vmem:[#allocation7] sm:$0xff] %v54
    %57 = vst [vmem:[#allocation7 + $0x8] sm:$0xff] %v55
    // Predicated region
    $region22: #{tpu_custom_call.1} parent=1 // pred_check
      _
    $region23: #{tpu_custom_call.1} parent=1 // pred_check_branch
      %59 = sbr.rel (0) target = $region25
    $region24: #{tpu_custom_call.1} parent=1 // pred_region
      %s61 = ssub.s32 256, 256
      %62 = vsyncadd [#allocation4], %s61
      %s64 = sshll.u32 [#allocation7], 4
      %s65 = int_to_ptr.vmem [resolvable:$true] %s64
      %67 = dma.vmem_to_hbm [thread:$0]  %s65, 256, %s2, [#allocation4]
    $region25: #{tpu_custom_call.1} parent=1 // pred_fallthru
      _
    // Predicated region
    $region26: #{tpu_custom_call.1} parent=1 // pred_check
      _
    $region27: #{tpu_custom_call.1} parent=1 // pred_check_branch
      %69 = sbr.rel (0) target = $region29
    $region28: #{tpu_custom_call.1} parent=1 // pred_region
      %70 = dma.done [#allocation4], 256
    $region29: #{tpu_custom_call.1} parent=1 // pred_fallthru
      _
    %71 = vsyncpa [#allocation3], 1
    %72 = vsyncpa [#allocation6], 1
    %73 = vsyncpa [#allocation4], 1

</llo_original>
